<compile_context>
chip_gen: v7x
topology: tpu7x:2x2x1
jax: 0.10.0
libtpu: 0.0.40
codegen_flags: <defaults>
</compile_context>

<pallas_src>
import numpy as np
import jax
import jax.numpy as jnp
from jax import lax
from jax.experimental import pallas as pl
from jax.experimental.pallas import tpu as pltpu

LANES = 128  # lane width of one packed row


def _round_up(x, m):
    return -(-x // m) * m


def _num_tensorcores_per_chip():
    """1 on single-TC chips (v5e/v6e); 2 on v7x megacore. Defaults to 1 (safe)."""
    try:
        kind = jax.devices()[0].device_kind.lower()
    except Exception:
        return 1
    if "v7" in kind:
        return 2
    return 1


# ----------------------------------------------------------------------------
# Pallas kernel: per-camera HBM->HBM DMA gather of packed camera blocks.
# ----------------------------------------------------------------------------
def gather_camera_blocks(flat_idx, camera_blocks, *, window=8):
    """Gather per-camera packed blocks with one contiguous DMA per camera.

    Args:
      flat_idx:      (N,) int32 flat camera indices into the camera bank.
      camera_blocks: (T, rows, 128) f32 tile-aligned per-camera blocks
                     (metadata row + flattened background rows).

    Returns:
      (N, rows, 128) gathered blocks.
    """
    n = int(flat_idx.shape[0])
    t, rows, lanes = camera_blocks.shape

    # 1 chunk on single-TC chips (no drain bubble), 2 "parallel" chunks on v7x
    # so megacore splits descriptor issue across its two TensorCores.
    num_chunks = max(1, min(_num_tensorcores_per_chip(), n))
    chunk = -(-n // num_chunks)

    def kernel(idx_ref, src_hbm, dst_hbm, sems):
        base = pl.program_id(0) * chunk
        count = jnp.minimum(chunk, n - base)  # dynamic trip count for this chunk

        def copy_desc(dst_row, src_row, slot):
            # Every copy in this kernel has an identical (rows, 128) byte count,
            # and each in-flight copy owns its own semaphore slot.
            return pltpu.make_async_copy(
                src_hbm.at[pl.ds(src_row, 1)],
                dst_hbm.at[pl.ds(dst_row, 1)],
                sems.at[slot],
            )

        # Issue one DMA per camera, keeping at most `window` in flight.
        def issue(j, carry):
            slot = lax.rem(j, window)
            # Scalar read BEFORE the wait (keeps SMEM sst->sld forwarding and the
            # next issue off the wait's critical path).
            cam = idx_ref[base + j]

            @pl.when(j >= window)
            def _retire():
                copy_desc(0, 0, slot).wait()  # retire the copy that used this slot

            copy_desc(base + j, cam, slot).start()
            return carry

        lax.fori_loop(0, count, issue, 0)

        # Drain the remaining in-flight copies.
        def drain(j, carry):
            copy_desc(0, 0, lax.rem(j, window)).wait()
            return carry

        lax.fori_loop(jnp.maximum(count - window, 0), count, drain, 0)

    grid_spec = pltpu.PrefetchScalarGridSpec(
        num_scalar_prefetch=1,
        grid=(num_chunks,),
        in_specs=[pl.BlockSpec(memory_space=pl.ANY)],   # camera blocks stay in HBM
        out_specs=pl.BlockSpec(memory_space=pl.ANY),    # written via DMA only
        scratch_shapes=[pltpu.SemaphoreType.DMA((window,))],
    )

    itemsize = camera_blocks.dtype.itemsize
    bytes_moved = 2 * n * rows * lanes * itemsize  # read + write per camera

    return pl.pallas_call(
        kernel,
        grid_spec=grid_spec,
        out_shape=jax.ShapeDtypeStruct((n, rows, lanes), camera_blocks.dtype),
        compiler_params=pltpu.CompilerParams(dimension_semantics=("parallel",)),
        cost_estimate=pl.CostEstimate(
            flops=0, transcendentals=0, bytes_accessed=bytes_moved
        ),
    )(flat_idx, camera_blocks)


# ----------------------------------------------------------------------------
# "AllCamerasModule" construction (deterministic synthetic parameters)
# ----------------------------------------------------------------------------
def build_all_cameras(key, num_scenes, cams_per_scene, height, width):
    """Build the per-camera packed parameter table (plus reference views)."""
    total = num_scenes * cams_per_scene
    k_extr, k_intr, k_ccb, k_ccs, k_bg = jax.random.split(key, 5)

    # extrinsics: Bc x 4 x 4 (last row fixed to [0,0,0,1])
    extr = jax.random.normal(k_extr, (total, 3, 4), dtype=jnp.float32)
    last_row = jnp.tile(jnp.array([[[0.0, 0.0, 0.0, 1.0]]], jnp.float32), (total, 1, 1))
    extrinsics = jnp.concatenate([extr, last_row], axis=1)                 # (T, 4, 4)

    # intrinsics: Bc x 3 x 3, pinhole-looking
    f = 100.0 + 10.0 * jax.random.uniform(k_intr, (total,), dtype=jnp.float32)
    zeros = jnp.zeros((total,), jnp.float32)
    ones = jnp.ones((total,), jnp.float32)
    cx = jnp.full((total,), width / 2.0, jnp.float32)
    cy = jnp.full((total,), height / 2.0, jnp.float32)
    intrinsics = jnp.stack(
        [f, zeros, cx, zeros, f, cy, zeros, zeros, ones], axis=-1
    ).reshape(total, 3, 3)                                                 # (T, 3, 3)

    # images_sizes: Bc x 2 (float, as in CameraModule.from_data)
    images_sizes = jnp.tile(
        jnp.array([[float(height), float(width)]], jnp.float32), (total, 1)
    )                                                                      # (T, 2)

    # Color corrections / backgrounds are learnable Parameters.  PyTorch init
    # is [1,1,1,0,0,0] / 255*ones; add small per-camera perturbations so the
    # gather check is meaningful (exact copies either way).
    cc_base = jnp.array([[1.0, 1.0, 1.0, 0.0, 0.0, 0.0]], jnp.float32)
    color_corrections_background = cc_base + 0.01 * jax.random.normal(
        k_ccb, (total, 6), dtype=jnp.float32
    )                                                                      # (T, 6)
    color_corrections_scene = cc_base + 0.01 * jax.random.normal(
        k_ccs, (total, 6), dtype=jnp.float32
    )                                                                      # (T, 6)
    backgrounds = 255.0 + jax.random.normal(
        k_bg, (total, 3, height, width), dtype=jnp.float32
    )                                                                      # (T, 3, H, W) reference view

    # ---- pack everything into one tile-aligned block per camera ----------
    # This packing happens ONCE at module construction (parameter storage
    # layout), so the forward pass never pays a full-table relayout.
    meta = jnp.concatenate(
        [
            extrinsics.reshape(total, 16),
            intrinsics.reshape(total, 9),
            images_sizes,
            color_corrections_background,
            color_corrections_scene,
        ],
        axis=-1,
    )                                                                      # (T, 39)
    meta = jnp.pad(meta, ((0, 0), (0, LANES - meta.shape[-1])))            # (T, 128)

    bg_elems = 3 * height * width
    bg_rows = -(-bg_elems // LANES)
    bg_flat = backgrounds.reshape(total, bg_elems)
    bg_flat = jnp.pad(bg_flat, ((0, 0), (0, bg_rows * LANES - bg_elems)))
    bg_flat = bg_flat.reshape(total, bg_rows, LANES)                       # (T, bgR, 128)

    rows_total = _round_up(1 + bg_rows, 8)                                 # tile-aligned rows
    camera_blocks = jnp.concatenate([meta[:, None, :], bg_flat], axis=1)   # (T, 1+bgR, 128)
    camera_blocks = jnp.pad(
        camera_blocks, ((0, 0), (0, rows_total - (1 + bg_rows)), (0, 0))
    )                                                                      # (T, rows, 128)

    return {
        "camera_blocks": camera_blocks,      # packed parameter/buffer storage
        "bg_rows": bg_rows,
        "image_hw": (height, width),
        "cams_per_scene": cams_per_scene,
        # reference (unpacked) views, kept only for the correctness check:
        "extrinsics": extrinsics,
        "intrinsics": intrinsics,
        "images_sizes": images_sizes,
        "color_corrections_background": color_corrections_background,
        "color_corrections_scene": color_corrections_scene,
        "backgrounds": backgrounds,
    }


# ----------------------------------------------------------------------------
# AllCamerasModule.forward(mode='get_scene_cam_feats', ...)
# ----------------------------------------------------------------------------
def all_cameras_forward(module, camera_scene_idx):
    """Returns (cameras_dict, backgrounds, color_corrs_background,
                color_corrs_scene, valid_fns)."""
    cps = module["cams_per_scene"]
    blocks = module["camera_blocks"]
    total, rows_total, _ = blocks.shape

    flat_idx = jnp.array(
        [s * cps + c for (s, c) in camera_scene_idx], dtype=jnp.int32
    )
    # Range-guard: an OOB index would otherwise silently gather a wrong row
    # (clamped gather, flagged by design).
    flat_idx = jnp.clip(flat_idx, 0, total - 1)

    gathered = gather_camera_blocks(flat_idx, blocks)      # (N, rows, 128)

    n = gathered.shape[0]
    h, w = module["image_hw"]
    bg_rows = module["bg_rows"]
    bg_elems = 3 * h * w

    meta = gathered[:, 0, :]
    extrinsics = meta[:, 0:16].reshape(n, 4, 4)
    intrinsics = meta[:, 16:25].reshape(n, 3, 3)
    images_sizes = meta[:, 25:27]
    color_corrs_background = meta[:, 27:33]
    color_corrs_scene = meta[:, 33:39]

    # NCHW view of the N gathered backgrounds only (knowingly accepted small
    # relayout; the full T-row table is never reshaped).
    bgs = (
        gathered[:, 1 : 1 + bg_rows, :]
        .reshape(n, bg_rows * LANES)[:, :bg_elems]
        .reshape(n, 3, h, w)
    )

    # TODO(synk): CameraFrustum.from_cameras / build_grid_sample_checker_function
    # build Python-side frustum objects & closures; represented here by the
    # concatenated camera tensors and valid_fns=None.
    cameras = {
        "extrinsics": extrinsics,
        "intrinsics": intrinsics,
        "images_sizes": images_sizes,
    }
    valid_fns = None
    return cameras, bgs, color_corrs_background, color_corrs_scene, valid_fns


# ----------------------------------------------------------------------------
# main
# ----------------------------------------------------------------------------
if __name__ == "__main__":
    key = jax.random.PRNGKey(0)

    num_scenes = 2          # e.g. "scene0_t0", "scene1_t0"
    cams_per_scene = 4
    H, W = 16, 16

    module = build_all_cameras(key, num_scenes, cams_per_scene, H, W)

    camera_scene_idx = [(0, 1), (1, 2), (0, 3), (1, 0)]

    cameras, bgs, cc_bg, cc_scene, valid_fns = all_cameras_forward(
        module, camera_scene_idx
    )
    jax.block_until_ready((cameras, bgs, cc_bg, cc_scene))

    # reference check against plain-numpy gather
    flat = np.array([s * cams_per_scene + c for (s, c) in camera_scene_idx])
    np.testing.assert_allclose(
        np.asarray(cameras["extrinsics"]),
        np.asarray(module["extrinsics"])[flat],
        rtol=0, atol=0,
    )
    np.testing.assert_allclose(
        np.asarray(cameras["intrinsics"]),
        np.asarray(module["intrinsics"])[flat],
        rtol=0, atol=0,
    )
    np.testing.assert_allclose(
        np.asarray(cameras["images_sizes"]),
        np.asarray(module["images_sizes"])[flat],
        rtol=0, atol=0,
    )
    np.testing.assert_allclose(
        np.asarray(bgs), np.asarray(module["backgrounds"])[flat], rtol=0, atol=0
    )
    np.testing.assert_allclose(
        np.asarray(cc_bg),
        np.asarray(module["color_corrections_background"])[flat],
        rtol=0, atol=0,
    )
    np.testing.assert_allclose(
        np.asarray(cc_scene),
        np.asarray(module["color_corrections_scene"])[flat],
        rtol=0, atol=0,
    )

    print("KERNEL_OK")
</pallas_src>

<mosaic_0001>
module attributes {stable_mosaic.version = 11 : i64} {
  func.func @kernel(%arg0: i32, %arg1: memref<4xi32, #tpu.memory_space<smem>>, %arg2: memref<8x8x128xf32, #tpu.memory_space<any>>, %arg3: memref<4x8x128xf32, #tpu.memory_space<any>>, %arg4: memref<8x!tpu.dma_semaphore, #tpu.memory_space<semaphore_mem>>) attributes {dimension_semantics = [#tpu.dimension_semantics<parallel>], iteration_bounds = array<i64: 1>, scalar_prefetch = 1 : i64, scratch_operands = 1 : i64, tpu.core_type = #tpu.core_type<tc>, window_params = [{}, {}]} {
    %c4_i32 = arith.constant 4 : i32
    %0 = arith.muli %arg0, %c4_i32 : i32
    %c4_i32_0 = arith.constant 4 : i32
    %1 = arith.subi %c4_i32_0, %0 : i32
    %c4_i32_1 = arith.constant 4 : i32
    %2 = arith.minsi %c4_i32_1, %1 : i32
    %c0_i32 = arith.constant 0 : i32
    %c0_i32_2 = arith.constant 0 : i32
    %3 = arith.subi %2, %c0_i32_2 : i32
    %4 = arith.addi %c0_i32_2, %3 : i32
    %c1_i32 = arith.constant 1 : i32
    scf.for %arg5 = %c0_i32_2 to %4 step %c1_i32  : i32 {
      %c8_i32_6 = arith.constant 8 : i32
      %9 = arith.remsi %arg5, %c8_i32_6 : i32
      %10 = arith.addi %0, %arg5 : i32
      %11 = arith.index_cast %10 : i32 to index
      %12 = memref.load %arg1[%11] : memref<4xi32, #tpu.memory_space<smem>>
      %c8_i32_7 = arith.constant 8 : i32
      %13 = arith.cmpi sge, %arg5, %c8_i32_7 : i32
      %14 = arith.extui %13 : i1 to i32
      %c0_i32_8 = arith.constant 0 : i32
      %15 = arith.cmpi ne, %14, %c0_i32_8 : i32
      scf.if %15 {
        %c0_i32_13 = arith.constant 0 : i32
        %c0_i32_14 = arith.constant 0 : i32
        %c0_i32_15 = arith.constant 0 : i32
        %21 = tpu.memref_slice %arg2[%c0_i32_13, %c0_i32_14, %c0_i32_15] : memref<8x8x128xf32, #tpu.memory_space<any>> -> memref<1x8x128xf32, #tpu.memory_space<any>>
        %c0_i32_16 = arith.constant 0 : i32
        %c0_i32_17 = arith.constant 0 : i32
        %c0_i32_18 = arith.constant 0 : i32
        %22 = tpu.memref_slice %arg3[%c0_i32_16, %c0_i32_17, %c0_i32_18] : memref<4x8x128xf32, #tpu.memory_space<any>> -> memref<1x8x128xf32, #tpu.memory_space<any>>
        %23 = tpu.memref_slice %arg4[%9] : memref<8x!tpu.dma_semaphore, #tpu.memory_space<semaphore_mem>> -> memref<1x!tpu.dma_semaphore, #tpu.memory_space<semaphore_mem>>
        %24 = tpu.memref_squeeze %23 : memref<1x!tpu.dma_semaphore, #tpu.memory_space<semaphore_mem>> -> memref<!tpu.dma_semaphore, #tpu.memory_space<semaphore_mem>>
        tpu.wait_dma2 semaphore(%24 : memref<!tpu.dma_semaphore, #tpu.memory_space<semaphore_mem>>) src(%21 : memref<1x8x128xf32, #tpu.memory_space<any>>) dst(%22 : memref<1x8x128xf32, #tpu.memory_space<any>>)
      } else {
      }
      %16 = arith.addi %0, %arg5 : i32
      %c0_i32_9 = arith.constant 0 : i32
      %c0_i32_10 = arith.constant 0 : i32
      %17 = tpu.memref_slice %arg2[%12, %c0_i32_9, %c0_i32_10] : memref<8x8x128xf32, #tpu.memory_space<any>> -> memref<1x8x128xf32, #tpu.memory_space<any>>
      %c0_i32_11 = arith.constant 0 : i32
      %c0_i32_12 = arith.constant 0 : i32
      %18 = tpu.memref_slice %arg3[%16, %c0_i32_11, %c0_i32_12] : memref<4x8x128xf32, #tpu.memory_space<any>> -> memref<1x8x128xf32, #tpu.memory_space<any>>
      %19 = tpu.memref_slice %arg4[%9] : memref<8x!tpu.dma_semaphore, #tpu.memory_space<semaphore_mem>> -> memref<1x!tpu.dma_semaphore, #tpu.memory_space<semaphore_mem>>
      %20 = tpu.memref_squeeze %19 : memref<1x!tpu.dma_semaphore, #tpu.memory_space<semaphore_mem>> -> memref<!tpu.dma_semaphore, #tpu.memory_space<semaphore_mem>>
      tpu.enqueue_dma source(%17 : memref<1x8x128xf32, #tpu.memory_space<any>>) target(%18 : memref<1x8x128xf32, #tpu.memory_space<any>>) target_semaphore(%20 : memref<!tpu.dma_semaphore, #tpu.memory_space<semaphore_mem>>)
    }
    %c8_i32 = arith.constant 8 : i32
    %5 = arith.subi %2, %c8_i32 : i32
    %c0_i32_3 = arith.constant 0 : i32
    %6 = arith.maxsi %5, %c0_i32_3 : i32
    %c0_i32_4 = arith.constant 0 : i32
    %7 = arith.subi %2, %6 : i32
    %8 = arith.addi %6, %7 : i32
    %c1_i32_5 = arith.constant 1 : i32
    scf.for %arg5 = %6 to %8 step %c1_i32_5  : i32 {
      %c8_i32_6 = arith.constant 8 : i32
      %9 = arith.remsi %arg5, %c8_i32_6 : i32
      %c0_i32_7 = arith.constant 0 : i32
      %c0_i32_8 = arith.constant 0 : i32
      %c0_i32_9 = arith.constant 0 : i32
      %10 = tpu.memref_slice %arg2[%c0_i32_7, %c0_i32_8, %c0_i32_9] : memref<8x8x128xf32, #tpu.memory_space<any>> -> memref<1x8x128xf32, #tpu.memory_space<any>>
      %c0_i32_10 = arith.constant 0 : i32
      %c0_i32_11 = arith.constant 0 : i32
      %c0_i32_12 = arith.constant 0 : i32
      %11 = tpu.memref_slice %arg3[%c0_i32_10, %c0_i32_11, %c0_i32_12] : memref<4x8x128xf32, #tpu.memory_space<any>> -> memref<1x8x128xf32, #tpu.memory_space<any>>
      %12 = tpu.memref_slice %arg4[%9] : memref<8x!tpu.dma_semaphore, #tpu.memory_space<semaphore_mem>> -> memref<1x!tpu.dma_semaphore, #tpu.memory_space<semaphore_mem>>
      %13 = tpu.memref_squeeze %12 : memref<1x!tpu.dma_semaphore, #tpu.memory_space<semaphore_mem>> -> memref<!tpu.dma_semaphore, #tpu.memory_space<semaphore_mem>>
      tpu.wait_dma2 semaphore(%13 : memref<!tpu.dma_semaphore, #tpu.memory_space<semaphore_mem>>) src(%10 : memref<1x8x128xf32, #tpu.memory_space<any>>) dst(%11 : memref<1x8x128xf32, #tpu.memory_space<any>>)
    }
    return
  }
}

</mosaic_0001>

<llo_original>
// kernel: tpu_custom_call.1
$region0: #{tpu_custom_call.1}
  #allocation0 [shape = 'u32[]', space=smem, size = 0x4, offset = 0x4, fixed_abs, tag = 'smem constant byte address 0x4 - core index']
  #allocation1 [shape = 'u32[144,128]{1,0:T(1,128)}', space=vmem, size = 0x12000, scoped, tag = 'internal scratch']
  #allocation2 [shape = 's32[8]{0}', space=sflag, size = 0x20, scoped, tag = 'scratch operand']
  #allocation3 [shape = 's32[1]{0}', space=sflag, size = 0x4, scoped, tag = 'scoped memory for tpu_custom_call.1']
  #allocation4 [shape = 'u8[512]{0}', space=smem, size = 0x200, scoped, tag = 'prefetched SMEM operand 0']
  #allocation5 [shape = 's32[]', space=sflag, size = 0x4, offset = 0, fixed_abs, tag = 'sflag constant byte address 0x0 - dummy sync flag']
  #allocation6 [shape = 'u32[0]{0}', space=smem, size = 0, offset = 0, fixed_abs, tag = 'smem constant byte address 0x0 - null']
  %s0 = inlined_call_operand.hbm [shape: s32[4], index: 0, kind: input, shape index: {}]
  %s1 = inlined_call_operand.hbm [shape: f32[8,8,128], index: 1, kind: input, shape index: {}]
  %s2 = inlined_call_operand.hbm [shape: f32[4,8,128], index: 2, kind: output, shape index: {}]
  %s3 = sld [smem:[#allocation0]]
  $region20: #{tpu_custom_call.1} parent=0
    _
  %s5 = ssub.s32 1, %s3
  %s6 = scalar_select 0, %s5, %s3
  %8 = dma.hbm_to_smem %s0, 16, [#allocation4], [#allocation3]
  %9 = dma.done [#allocation3], 16
  %10 = sfence
  %s11 = smul.u32 0, 4
  %s12 = ssub.s32 4, %s11
  %p13 = scmp.lt.s32.totalorder %s12, 4
  %s14 = scalar_select %p13, %s12, 4
  // While loop
  $region2: #{tpu_custom_call.1} parent=0 // loop_pre_header
    _
  $region3: #{tpu_custom_call.1} parent=0 // loop_header
    %s16 = sphi 0, %s18
    %p17 = scmp.ge.s32.totalorder %s16, %s14
  $region4: #{tpu_custom_call.1} parent=0 // loop_header_branch
    %20 = sbr.rel (%p17) target = $region8
  $region5: #{tpu_custom_call.1} parent=0 // loop_body
    %p21 = scmp.lt.s32.totalorder %s16, 0
    %s22 = ssub.s32 0, %s16
    %s23 = scalar_select %p21, %s22, %s16
    %s24 = sand.u32 %s23, 7
    %s25 = ssub.s32 0, %s24
    %s26 = scalar_select %p21, %s25, %s24
    %s27 = sadd.s32 %s11, %s16
    %s28 = sld [smem:[#allocation4 + %s27]]
    %p29 = scmp.ge.s32.totalorder %s16, 8
    // Predicated region
    $region9: #{tpu_custom_call.1} parent=5 // pred_check
      %p30 = pneg %p29
    $region10: #{tpu_custom_call.1} parent=5 // pred_check_branch
      %32 = sbr.rel (%p30) target = $region12
    $region11: #{tpu_custom_call.1} parent=5 // pred_region
      %s33 = scalar_lea.sflag [#allocation2], %s26
      %s34 = smul.u32 1, 8
      %s35 = smul.u32 %s34, 1
      %s36 = sshll.u32 %s35, 4
      %37 = dma.done %s33, %s36
    $region12: #{tpu_custom_call.1} parent=5 // pred_fallthru
      _
    %s38 = smul.u32 %s28, 8
    %s39 = smul.addr %s38, 16
    %s40 = scalar_lea.hbm %s1, %s39
    %s41 = smul.u32 %s27, 8
    %s42 = smul.addr %s41, 16
    %s43 = scalar_lea.hbm %s2, %s42
    %s44 = scalar_lea.sflag [#allocation2], %s26
    %s46 = sshll.u32 1, 14
    %s47 = sxor.u32 4294967295, %s46
    %s50 = sshll.u32 3, 24
    %s51 = sxor.u32 4294967295, %s50
    %s52 = sand.u32 0, %s51
    %s54 = sor.u32 %s52, 0
    %57 = dma.general %s40, 128, %s43, %s44, [#allocation5], [#allocation6], %s54, 0
  $region6: #{tpu_custom_call.1} parent=0 // loop_footer
    %s18 = sadd.s32 %s16, 1
  $region7: #{tpu_custom_call.1} parent=0 // loop_footer_branch
    %15 = sbr.rel target = $region3
  $region8: #{tpu_custom_call.1} parent=0 // loop_exit
    _
  %s58 = ssub.s32 %s14, 8
  %p59 = scmp.gt.s32.totalorder %s58, 0
  %s60 = scalar_select %p59, %s58, 0
  // While loop
  $region13: #{tpu_custom_call.1} parent=0 // loop_pre_header
    _
  $region14: #{tpu_custom_call.1} parent=0 // loop_header
    %s62 = sphi %s60, %s64
    %p63 = scmp.ge.s32.totalorder %s62, %s14
  $region15: #{tpu_custom_call.1} parent=0 // loop_header_branch
    %66 = sbr.rel (%p63) target = $region19
  $region16: #{tpu_custom_call.1} parent=0 // loop_body
    %p67 = scmp.lt.s32.totalorder %s62, 0
    %s68 = ssub.s32 0, %s62
    %s69 = scalar_select %p67, %s68, %s62
    %s70 = sand.u32 %s69, 7
    %s71 = ssub.s32 0, %s70
    %s72 = scalar_select %p67, %s71, %s70
    %s73 = scalar_lea.sflag [#allocation2], %s72
    %s74 = smul.u32 1, 8
    %s75 = smul.u32 %s74, 1
    %s76 = sshll.u32 %s75, 4
    %77 = dma.done %s73, %s76
  $region17: #{tpu_custom_call.1} parent=0 // loop_footer
    %s64 = sadd.s32 %s62, 1
  $region18: #{tpu_custom_call.1} parent=0 // loop_footer_branch
    %61 = sbr.rel target = $region14
  $region19: #{tpu_custom_call.1} parent=0 // loop_exit
    _
  %78 = vsyncmov [#allocation2]
  %s79 = vpop.sfrf %78
  %p80 = scmp.eq.s32.totalorder %s79, 0
  %p81 = pneg %p80
  %83 = shalt.err (%p81)
  %s84 = scalar_lea.sflag [#allocation2], 1
  %85 = vsyncmov %s84
  %s86 = vpop.sfrf %85
  %p87 = scmp.eq.s32.totalorder %s86, 0
  %p88 = pneg %p87
  %90 = shalt.err (%p88)
  %s91 = scalar_lea.sflag [#allocation2], 2
  %92 = vsyncmov %s91
  %s93 = vpop.sfrf %92
  %p94 = scmp.eq.s32.totalorder %s93, 0
  %p95 = pneg %p94
  %97 = shalt.err (%p95)
  %s98 = scalar_lea.sflag [#allocation2], 3
  %99 = vsyncmov %s98
  %s100 = vpop.sfrf %99
  %p101 = scmp.eq.s32.totalorder %s100, 0
  %p102 = pneg %p101
  %104 = shalt.err (%p102)
  %s105 = scalar_lea.sflag [#allocation2], 4
  %106 = vsyncmov %s105
  %s107 = vpop.sfrf %106
  %p108 = scmp.eq.s32.totalorder %s107, 0
  %p109 = pneg %p108
  %111 = shalt.err (%p109)
  %s112 = scalar_lea.sflag [#allocation2], 5
  %113 = vsyncmov %s112
  %s114 = vpop.sfrf %113
  %p115 = scmp.eq.s32.totalorder %s114, 0
  %p116 = pneg %p115
  %118 = shalt.err (%p116)
  %s119 = scalar_lea.sflag [#allocation2], 6
  %120 = vsyncmov %s119
  %s121 = vpop.sfrf %120
  %p122 = scmp.eq.s32.totalorder %s121, 0
  %p123 = pneg %p122
  %125 = shalt.err (%p123)
  %s126 = scalar_lea.sflag [#allocation2], 7
  %127 = vsyncmov %s126
  %s128 = vpop.sfrf %127
  %p129 = scmp.eq.s32.totalorder %s128, 0
  %p130 = pneg %p129
  %132 = shalt.err (%p130)

</llo_original>
